<compile_context>
chip_gen: v5e
topology: v5e:2x2
jax: 0.10.0
libtpu: 0.0.40
codegen_flags: <defaults>
</compile_context>

<pallas_src>
import functools

import jax
import jax.numpy as jnp
from jax.experimental import pallas as pl
from jax.experimental.pallas import tpu as pltpu

_VMEM_LIMIT_BYTES = 48 * 1024 * 1024          # <= v7x's 64 MiB physical VMEM
_FUSED_VMEM_BUDGET = 40 * 1024 * 1024         # eligibility threshold (cons.)


# --------------------------------------------------------------------------
# Fused single-pass kernel: pool + SE-MLP + scale for one sample per step.
# --------------------------------------------------------------------------
def _ca_fused_kernel(x_ref, w1t_ref, b1_ref, w2_ref, b2_ref, o_ref, *,
                     inv_hw, c_red):
    # x_ref block: (1, C, HW); weights are tiny, resident VMEM blocks.
    xf = x_ref[0].astype(jnp.float32)                      # (C, HW)
    mean = jnp.sum(xf, axis=1, keepdims=True) * inv_hw     # (C, 1) global pool

    w1t = w1t_ref[...]                                     # (C, Cr)
    b1r = b1_ref[...]                                      # (1, Cr)
    w2m = w2_ref[...]                                      # (C, Cr)
    z = b2_ref[...]                                        # (C, 1) start = b2

    # SE-MLP, unrolled over the C//r hidden units (tiny, static).
    #   h_j = relu(sum_c w1[j,c] * mean[c] + b1[j])
    #   z   = b2 + sum_j w2[:, j] * h_j
    for j in range(c_red):
        hj = jnp.sum(w1t[:, j:j + 1] * mean, axis=0, keepdims=True) \
             + b1r[:, j:j + 1]                             # (1, 1)
        hj = jnp.maximum(hj, 0.0)
        z = z + w2m[:, j:j + 1] * hj                       # (C, 1)

    s = jax.nn.sigmoid(z)                                  # (C, 1)
    o_ref[0] = (xf * s).astype(o_ref.dtype)                # broadcast rescale


# --------------------------------------------------------------------------
# Fallback kernels (x stripe too big for VMEM): tiled pool + tiled scale.
# --------------------------------------------------------------------------
def _pool_sum_kernel(x_ref, ysum_ref):
    # grid = (row_tiles, hw_tiles); hw is the reduction ("arbitrary") axis and
    # the (TR, 1) output block stays resident across it (accumulator pattern).
    @pl.when(pl.program_id(1) == 0)
    def _():
        ysum_ref[...] = jnp.zeros_like(ysum_ref)

    ysum_ref[...] += jnp.sum(x_ref[...].astype(jnp.float32), axis=1,
                             keepdims=True)


def _scale_kernel(x_ref, s_ref, o_ref):
    # (TR, THW) * (TR, 1) broadcast along lanes; math in f32, store in x dtype.
    o_ref[...] = (x_ref[...].astype(jnp.float32) * s_ref[...]).astype(o_ref.dtype)


# --------------------------------------------------------------------------
# Tiling helpers.
# --------------------------------------------------------------------------
def _divisor_tile(total, unit, max_tile):
    """Largest multiple of `unit` dividing `total`, at most `max_tile`.

    Falls back to `total` (full axis) if no such divisor exists, which keeps
    the (8,128) block constraint satisfied (block == full dim)."""
    if total <= max_tile:
        return total
    best = None
    t = unit
    while t <= max_tile:
        if total % t == 0:
            best = t
        t += unit
    return best if best is not None else total


def _pick_tiles(rows, hw, itemsize, max_block_bytes):
    # Dtype-aware sublane unit (8 f32 / 16 bf16 / 32 int8) -- packed tiles.
    unit_r = 8 * max(1, 4 // itemsize)
    budget = max(1, max_block_bytes // itemsize)
    # Lane tile first: lane-dense, multiple of 128.
    thw = _divisor_tile(hw, 128, max(128, budget // unit_r))
    # Then re-expand the row tile to fill the remaining byte budget, but keep
    # >= 2 row steps when possible so the "parallel" axis can be split across
    # TensorCores on v7x.
    max_rows = max(unit_r, budget // max(thw, 1))
    if rows >= 2 * unit_r:
        half = (rows // 2) // unit_r * unit_r
        if half >= unit_r:
            max_rows = min(max_rows, half)
    tr = _divisor_tile(rows, unit_r, max_rows)
    return tr, thw


# --------------------------------------------------------------------------
# Public entry point.
# --------------------------------------------------------------------------
def ca_layer(x_nchw, w1, b1, w2, b2, *, max_block_bytes=8 * 1024 * 1024,
             force_fallback=False):
    """Channel-attention layer (squeeze-and-excitation), PyTorch NCHW layout.

    x_nchw: (N, C, H, W)
    w1:     (C//r, C)   conv1 1x1 weight (squeezed)
    b1:     (C//r,)
    w2:     (C, C//r)   conv2 1x1 weight (squeezed)
    b2:     (C,)
    returns (N, C, H, W)
    """
    N, C, H, W = x_nchw.shape
    Cr = w1.shape[0]
    HW = H * W
    rows = N * C
    itemsize = x_nchw.dtype.itemsize

    w1f = w1.astype(jnp.float32)
    b1f = b1.astype(jnp.float32)
    w2f = w2.astype(jnp.float32)
    b2f = b2.astype(jnp.float32)

    # --- fused single-read path -------------------------------------------
    stripe_in = C * HW * itemsize
    stripe_f32 = C * HW * 4
    # 2x double-buffered in + 2x double-buffered out + f32 temporaries.
    fused_est = 4 * stripe_in + 3 * stripe_f32
    if (not force_fallback) and fused_est <= _FUSED_VMEM_BUDGET:
        x3 = x_nchw.reshape(N, C, HW)                   # free view
        w1t = jnp.transpose(w1f)                        # (C, Cr)
        b1r = b1f.reshape(1, Cr)                        # (1, Cr)
        b2c = b2f.reshape(C, 1)                         # (C, 1)

        out3 = pl.pallas_call(
            functools.partial(_ca_fused_kernel, inv_hw=float(1.0 / HW),
                              c_red=Cr),
            out_shape=jax.ShapeDtypeStruct((N, C, HW), x3.dtype),
            grid_spec=pltpu.PrefetchScalarGridSpec(
                num_scalar_prefetch=0,
                grid=(N,),
                in_specs=[pl.BlockSpec((1, C, HW), lambda n: (n, 0, 0)),
                          pl.BlockSpec((C, Cr), lambda n: (0, 0)),
                          pl.BlockSpec((1, Cr), lambda n: (0, 0)),
                          pl.BlockSpec((C, Cr), lambda n: (0, 0)),
                          pl.BlockSpec((C, 1), lambda n: (0, 0))],
                out_specs=pl.BlockSpec((1, C, HW), lambda n: (n, 0, 0))),
            compiler_params=pltpu.CompilerParams(
                dimension_semantics=("parallel",),
                vmem_limit_bytes=_VMEM_LIMIT_BYTES),
        )(x3, w1t, b1r, w2f, b2c)
        return out3.reshape(N, C, H, W)

    # --- fallback: tiled pool + jnp MLP + tiled scale -----------------------
    x2 = x_nchw.reshape(rows, HW)                       # free view
    tr, thw = _pick_tiles(rows, HW, itemsize, max_block_bytes)
    grid = (rows // tr, HW // thw)

    ysum = pl.pallas_call(
        _pool_sum_kernel,
        out_shape=jax.ShapeDtypeStruct((rows, 1), jnp.float32),
        grid_spec=pltpu.PrefetchScalarGridSpec(
            num_scalar_prefetch=0,
            grid=grid,
            in_specs=[pl.BlockSpec((tr, thw), lambda r, t: (r, t))],
            out_specs=pl.BlockSpec((tr, 1), lambda r, t: (r, 0))),
        compiler_params=pltpu.CompilerParams(
            dimension_semantics=("parallel", "arbitrary"),
            vmem_limit_bytes=_VMEM_LIMIT_BYTES),
    )(x2)

    # Tiny SE-MLP in plain jnp (XLA): not worth a kernel launch.
    y = ysum.reshape(N, C) * (1.0 / HW)                 # (N, C) means
    h = jnp.maximum(y @ w1f.T + b1f, 0.0)               # (N, Cr)
    s = jax.nn.sigmoid(h @ w2f.T + b2f)                 # (N, C) f32
    s2 = s.reshape(rows, 1)                             # free view

    out2 = pl.pallas_call(
        _scale_kernel,
        out_shape=jax.ShapeDtypeStruct((rows, HW), x2.dtype),
        grid_spec=pltpu.PrefetchScalarGridSpec(
            num_scalar_prefetch=0,
            grid=grid,
            in_specs=[pl.BlockSpec((tr, thw), lambda r, t: (r, t)),
                      pl.BlockSpec((tr, 1), lambda r, t: (r, 0))],
            out_specs=pl.BlockSpec((tr, thw), lambda r, t: (r, t))),
        compiler_params=pltpu.CompilerParams(
            dimension_semantics=("parallel", "parallel"),
            vmem_limit_bytes=_VMEM_LIMIT_BYTES),
    )(x2, s2)

    return out2.reshape(N, C, H, W)


def ca_layer_ref(x, w1, b1, w2, b2):
    """Pure-JAX reference matching the PyTorch forward semantics (NCHW)."""
    y = jnp.mean(x.astype(jnp.float32), axis=(2, 3))   # (N, C)
    h = jnp.maximum(y @ w1.T + b1, 0.0)                # (N, Cr)
    s = jax.nn.sigmoid(h @ w2.T + b2)                  # (N, C)
    return (x.astype(jnp.float32) * s[:, :, None, None]).astype(x.dtype)


if __name__ == "__main__":
    # Small shapes consistent with the module: channel=32, reduction=16.
    N, C, H, W = 2, 32, 16, 16
    reduction = 16
    Cr = C // reduction

    key = jax.random.PRNGKey(0)
    kx, k1, k2, k3, k4 = jax.random.split(key, 5)

    x = jax.random.normal(kx, (N, C, H, W), dtype=jnp.float32)

    # Deterministic synthetic parameters (PyTorch-style uniform fan-in init).
    bound1 = 1.0 / jnp.sqrt(C)
    w1 = jax.random.uniform(k1, (Cr, C), jnp.float32, -bound1, bound1)
    b1 = jax.random.uniform(k2, (Cr,), jnp.float32, -bound1, bound1)
    bound2 = 1.0 / jnp.sqrt(Cr)
    w2 = jax.random.uniform(k3, (C, Cr), jnp.float32, -bound2, bound2)
    b2 = jax.random.uniform(k4, (C,), jnp.float32, -bound2, bound2)

    ref = jax.block_until_ready(ca_layer_ref(x, w1, b1, w2, b2))

    # 1) Fused single-read path (default).
    out = jax.block_until_ready(ca_layer(x, w1, b1, w2, b2))
    assert out.shape == (N, C, H, W), out.shape
    assert jnp.allclose(out, ref, atol=1e-5, rtol=1e-5), (
        float(jnp.max(jnp.abs(out - ref))))

    # 2) Tiled fallback path (forced small blocks so the HW-accumulator and
    #    multi-row-tile code paths run).
    out_fb = jax.block_until_ready(
        ca_layer(x, w1, b1, w2, b2, force_fallback=True,
                 max_block_bytes=4 * 1024))
    assert jnp.allclose(out_fb, ref, atol=1e-5, rtol=1e-5), (
        float(jnp.max(jnp.abs(out_fb - ref))))

    print("KERNEL_OK")
</pallas_src>

<mosaic_0001>
module attributes {stable_mosaic.version = 11 : i64} {
  func.func @_ca_fused_kernel(%arg0: i32, %arg1: memref<1x32x256xf32, #tpu.memory_space<vmem>>, %arg2: memref<32x2xf32, #tpu.memory_space<vmem>>, %arg3: memref<1x2xf32, #tpu.memory_space<vmem>>, %arg4: memref<32x2xf32, #tpu.memory_space<vmem>>, %arg5: memref<32x1xf32, #tpu.memory_space<vmem>>, %arg6: memref<1x32x256xf32, #tpu.memory_space<vmem>>) attributes {dimension_semantics = [#tpu.dimension_semantics<parallel>], iteration_bounds = array<i64: 2>, scalar_prefetch = 0 : i64, scratch_operands = 0 : i64, tpu.core_type = #tpu.core_type<tc>, window_params = [{transform_indices = @transform_0, window_bounds = array<i64: 1, 32, 256>}, {pipeline_mode = #tpu.pipeline_mode<synchronous>, transform_indices = @transform_1, window_bounds = array<i64: 32, 2>}, {pipeline_mode = #tpu.pipeline_mode<synchronous>, transform_indices = @transform_2, window_bounds = array<i64: 1, 2>}, {pipeline_mode = #tpu.pipeline_mode<synchronous>, transform_indices = @transform_3, window_bounds = array<i64: 32, 2>}, {pipeline_mode = #tpu.pipeline_mode<synchronous>, transform_indices = @transform_4, window_bounds = array<i64: 32, 1>}, {transform_indices = @transform_5, window_bounds = array<i64: 1, 32, 256>}]} {
    %c0 = arith.constant 0 : index
    %c0_0 = arith.constant 0 : index
    %c0_1 = arith.constant 0 : index
    %0 = vector.load %arg1[%c0, %c0_0, %c0_1] : memref<1x32x256xf32, #tpu.memory_space<vmem>>, vector<1x32x256xf32>
    %1 = vector.shape_cast %0 : vector<1x32x256xf32> to vector<32x256xf32>
    %cst = arith.constant dense<0.000000e+00> : vector<32xf32>
    %2 = vector.multi_reduction <add>, %1, %cst [1] : vector<32x256xf32> to vector<32xf32>
    %3 = vector.shape_cast %2 : vector<32xf32> to vector<32x1xf32>
    %cst_2 = arith.constant 3.906250e-03 : f32
    %4 = vector.broadcast %cst_2 : f32 to vector<32x1xf32>
    %5 = arith.mulf %3, %4 : vector<32x1xf32>
    %c0_3 = arith.constant 0 : index
    %c0_4 = arith.constant 0 : index
    %6 = vector.load %arg2[%c0_3, %c0_4] : memref<32x2xf32, #tpu.memory_space<vmem>>, vector<32x2xf32>
    %c0_5 = arith.constant 0 : index
    %c0_6 = arith.constant 0 : index
    %7 = vector.load %arg3[%c0_5, %c0_6] : memref<1x2xf32, #tpu.memory_space<vmem>>, vector<1x2xf32>
    %c0_7 = arith.constant 0 : index
    %c0_8 = arith.constant 0 : index
    %8 = vector.load %arg4[%c0_7, %c0_8] : memref<32x2xf32, #tpu.memory_space<vmem>>, vector<32x2xf32>
    %c0_9 = arith.constant 0 : index
    %c0_10 = arith.constant 0 : index
    %9 = vector.load %arg5[%c0_9, %c0_10] : memref<32x1xf32, #tpu.memory_space<vmem>>, vector<32x1xf32>
    %10 = vector.extract_strided_slice %6 {offsets = [0, 0], sizes = [32, 1], strides = [1, 1]} : vector<32x2xf32> to vector<32x1xf32>
    %11 = arith.mulf %10, %5 : vector<32x1xf32>
    %cst_11 = arith.constant dense<0.000000e+00> : vector<1xf32>
    %12 = vector.multi_reduction <add>, %11, %cst_11 [0] : vector<32x1xf32> to vector<1xf32>
    %13 = vector.shape_cast %12 : vector<1xf32> to vector<1x1xf32>
    %14 = vector.extract_strided_slice %7 {offsets = [0, 0], sizes = [1, 1], strides = [1, 1]} : vector<1x2xf32> to vector<1x1xf32>
    %15 = arith.addf %13, %14 : vector<1x1xf32>
    %cst_12 = arith.constant 0.000000e+00 : f32
    %16 = vector.broadcast %cst_12 : f32 to vector<1x1xf32>
    %17 = arith.maximumf %15, %16 : vector<1x1xf32>
    %18 = vector.extract_strided_slice %8 {offsets = [0, 0], sizes = [32, 1], strides = [1, 1]} : vector<32x2xf32> to vector<32x1xf32>
    %19 = vector.broadcast %17 : vector<1x1xf32> to vector<32x1xf32>
    %20 = arith.mulf %18, %19 : vector<32x1xf32>
    %21 = arith.addf %9, %20 : vector<32x1xf32>
    %22 = vector.extract_strided_slice %6 {offsets = [0, 1], sizes = [32, 1], strides = [1, 1]} : vector<32x2xf32> to vector<32x1xf32>
    %23 = arith.mulf %22, %5 : vector<32x1xf32>
    %cst_13 = arith.constant dense<0.000000e+00> : vector<1xf32>
    %24 = vector.multi_reduction <add>, %23, %cst_13 [0] : vector<32x1xf32> to vector<1xf32>
    %25 = vector.shape_cast %24 : vector<1xf32> to vector<1x1xf32>
    %26 = vector.extract_strided_slice %7 {offsets = [0, 1], sizes = [1, 1], strides = [1, 1]} : vector<1x2xf32> to vector<1x1xf32>
    %27 = arith.addf %25, %26 : vector<1x1xf32>
    %cst_14 = arith.constant 0.000000e+00 : f32
    %28 = vector.broadcast %cst_14 : f32 to vector<1x1xf32>
    %29 = arith.maximumf %27, %28 : vector<1x1xf32>
    %30 = vector.extract_strided_slice %8 {offsets = [0, 1], sizes = [32, 1], strides = [1, 1]} : vector<32x2xf32> to vector<32x1xf32>
    %31 = vector.broadcast %29 : vector<1x1xf32> to vector<32x1xf32>
    %32 = arith.mulf %30, %31 : vector<32x1xf32>
    %33 = arith.addf %21, %32 : vector<32x1xf32>
    %34 = arith.negf %33 : vector<32x1xf32>
    %35 = math.exp %34 : vector<32x1xf32>
    %cst_15 = arith.constant 1.000000e+00 : f32
    %36 = vector.broadcast %cst_15 : f32 to vector<32x1xf32>
    %37 = arith.addf %36, %35 : vector<32x1xf32>
    %38 = arith.divf %36, %37 : vector<32x1xf32>
    %39 = vector.broadcast %38 : vector<32x1xf32> to vector<32x256xf32>
    %40 = arith.mulf %1, %39 : vector<32x256xf32>
    %c0_16 = arith.constant 0 : index
    %c0_17 = arith.constant 0 : index
    %c0_18 = arith.constant 0 : index
    %41 = vector.load %arg6[%c0_16, %c0_17, %c0_18] : memref<1x32x256xf32, #tpu.memory_space<vmem>>, vector<1x32x256xf32>
    %42 = vector.shape_cast %41 : vector<1x32x256xf32> to vector<32x256xf32>
    %43 = vector.shape_cast %40 : vector<32x256xf32> to vector<1x32x256xf32>
    tpu.vector_store %arg6[%c0_16, %c0_17, %c0_18], %43 {strides = array<i32>} : memref<1x32x256xf32, #tpu.memory_space<vmem>>, vector<1x32x256xf32>,
    return
  }
  func.func @transform_0(%arg0: i32) -> (i32, i32, i32) {
    %c0_i32 = arith.constant 0 : i32
    %c0_i32_0 = arith.constant 0 : i32
    %c0_i32_1 = arith.constant 0 : i32
    return %arg0, %c0_i32, %c0_i32_0 : i32, i32, i32
  }
  func.func @transform_1(%arg0: i32) -> (i32, i32) {
    %c0_i32 = arith.constant 0 : i32
    %c0_i32_0 = arith.constant 0 : i32
    %c0_i32_1 = arith.constant 0 : i32
    return %c0_i32, %c0_i32_0 : i32, i32
  }
  func.func @transform_2(%arg0: i32) -> (i32, i32) {
    %c0_i32 = arith.constant 0 : i32
    %c0_i32_0 = arith.constant 0 : i32
    %c0_i32_1 = arith.constant 0 : i32
    return %c0_i32, %c0_i32_0 : i32, i32
  }
  func.func @transform_3(%arg0: i32) -> (i32, i32) {
    %c0_i32 = arith.constant 0 : i32
    %c0_i32_0 = arith.constant 0 : i32
    %c0_i32_1 = arith.constant 0 : i32
    return %c0_i32, %c0_i32_0 : i32, i32
  }
  func.func @transform_4(%arg0: i32) -> (i32, i32) {
    %c0_i32 = arith.constant 0 : i32
    %c0_i32_0 = arith.constant 0 : i32
    %c0_i32_1 = arith.constant 0 : i32
    return %c0_i32, %c0_i32_0 : i32, i32
  }
  func.func @transform_5(%arg0: i32) -> (i32, i32, i32) {
    %c0_i32 = arith.constant 0 : i32
    %c0_i32_0 = arith.constant 0 : i32
    %c0_i32_1 = arith.constant 0 : i32
    return %arg0, %c0_i32, %c0_i32_0 : i32, i32, i32
  }
}

</mosaic_0001>

<llo_original>
// kernel: tpu_custom_call.1
$region0: #{tpu_custom_call.1}
  #allocation0 [shape = 'u32[]', space=smem, size = 0x4, offset = 0x4, fixed_abs, tag = 'smem constant byte address 0x4 - core index']
  #allocation1 [shape = 'u32[72,128]{1,0:T(1,128)}', space=vmem, size = 0x9000, scoped, tag = 'internal scratch']
  %s0 = inlined_call_operand.hbm [shape: f32[2,32,256], index: 0, kind: input, shape index: {}]
  %s1 = inlined_call_operand.vmem [shape: f32[32,2], index: 1, kind: input, shape index: {}]
  %s2 = inlined_call_operand.vmem [shape: f32[1,2], index: 2, kind: input, shape index: {}]
  %s3 = inlined_call_operand.vmem [shape: f32[32,2], index: 3, kind: input, shape index: {}]
  %s4 = inlined_call_operand.vmem [shape: f32[32,1], index: 4, kind: input, shape index: {}]
  %s5 = inlined_call_operand.hbm [shape: f32[2,32,256], index: 5, kind: output, shape index: {}]
  %s6 = sld [smem:[#allocation0]]
  $region57: #{tpu_custom_call.1} parent=0
    _
  %s8 = ssub.s32 1, %s6
  %s9 = scalar_select 0, %s8, %s6
  $region1: #{tpu_custom_call.1} parent=0
    #allocation2 [shape = 'u8[65536]{0}', space=vmem, size = 0x10000, scoped, tag = 'input window, operand 0']
    #allocation3 [shape = 's32[2]{0}', space=sflag, size = 0x8, scoped, tag = 'scoped memory for tpu_custom_call.1']
    #allocation4 [shape = 's32[2]{0}', space=sflag, size = 0x8, scoped, tag = 'scoped memory for tpu_custom_call.1']
    #allocation5 [shape = 'u8[65536]{0}', space=vmem, size = 0x10000, scoped, tag = 'output window, operand 0']
    %10 = vsyncpa [#allocation3], 0
    %s11 = scalar_lea.sflag [#allocation3], 1
    %12 = vsyncpa %s11, 0
    %13 = vsyncpa [#allocation4], 0
    %s14 = scalar_lea.sflag [#allocation4], 1
    %15 = vsyncpa %s14, 0
    loop: start=0, step=1, limit=4
    $region2: #{tpu_custom_call.1} parent=1 // loop_pre_header
      _
    $region3: #{tpu_custom_call.1} parent=1 // loop_header
      %s17 = sphi 0, %s21
      %p18 = scmp.ge.s32.totalorder %s17, 4
      %s27 = sphi 0, %s29
      %s30 = sphi 0, %s27
      %s31 = sphi 0, %s30
      %s47 = sphi 0, %s31
      %s51 = sphi 0, %s51
      %s53 = sphi 0, %s51
      %s54 = sphi 0, %s53
      %s68 = sphi 0, %s54
      %s72 = sphi 0, %s72
      %s74 = sphi 0, %s72
      %s75 = sphi 0, %s74
      %s89 = sphi 0, %s75
      %s93 = sphi 0, %s93
      %s95 = sphi 0, %s93
      %s96 = sphi 0, %s95
      %s110 = sphi 0, %s96
      %s114 = sphi 0, %s114
      %s116 = sphi 0, %s114
      %s117 = sphi 0, %s116
      %s131 = sphi 0, %s117
      %s137 = sphi 0, %s139
      %s140 = sphi 0, %s137
      %s141 = sphi 0, %s140
      %s157 = sphi 0, %s141
    $region4: #{tpu_custom_call.1} parent=1 // loop_header_branch
      %20 = sbr.rel (%p18) target = $region8
    $region5: #{tpu_custom_call.1} parent=1 // loop_body
      %s22 = ssub.s32 %s17, 1
      %s23 = ssub.s32 %s17, 2
      %s24 = sadd.s32 %s17, 1
      %s25 = ssub.s32 %s17, %s24
      %p26 = scmp.eq.s32.totalorder %s25, 0
      %s28 = sadd.s32 %s27, 1
      %s29 = scalar_select %p26, %s27, %s28
      %p32 = pneg %p26
      %p33 = scmp.eq.s32.totalorder %s17, 1
      %p34 = por %p32, %p33
      %p35 = scmp.ne.s32.totalorder %s27, %s30
      %p36 = scmp.eq.s32.totalorder %s17, 0
      %p37 = por %p35, %p36
      %p38 = scmp.ne.s32.totalorder %s27, %s30
      %p39 = scmp.eq.s32.totalorder %s22, 1
      %p40 = por %p38, %p39
      %p41 = scmp.ne.s32.totalorder %s30, %s31
      %p42 = scmp.eq.s32.totalorder %s22, 0
      %p43 = por %p41, %p42
      %p44 = scmp.ne.s32.totalorder %s30, %s31
      %p45 = scmp.eq.s32.totalorder %s23, 1
      %p46 = por %p44, %p45
      %p48 = scmp.ne.s32.totalorder %s31, %s47
      %p49 = scmp.eq.s32.totalorder %s23, 0
      %p50 = por %p48, %p49
      %s52 = sadd.s32 %s51, 1
      %p55 = scmp.eq.s32.totalorder %s17, 1
      %p56 = scmp.ne.s32.totalorder %s51, %s53
      %p57 = scmp.eq.s32.totalorder %s17, 0
      %p58 = por %p56, %p57
      %p59 = scmp.ne.s32.totalorder %s51, %s53
      %p60 = scmp.eq.s32.totalorder %s22, 1
      %p61 = por %p59, %p60
      %p62 = scmp.ne.s32.totalorder %s53, %s54
      %p63 = scmp.eq.s32.totalorder %s22, 0
      %p64 = por %p62, %p63
      %p65 = scmp.ne.s32.totalorder %s53, %s54
      %p66 = scmp.eq.s32.totalorder %s23, 1
      %p67 = por %p65, %p66
      %p69 = scmp.ne.s32.totalorder %s54, %s68
      %p70 = scmp.eq.s32.totalorder %s23, 0
      %p71 = por %p69, %p70
      %s73 = sadd.s32 %s72, 1
      %p76 = scmp.eq.s32.totalorder %s17, 1
      %p77 = scmp.ne.s32.totalorder %s72, %s74
      %p78 = scmp.eq.s32.totalorder %s17, 0
      %p79 = por %p77, %p78
      %p80 = scmp.ne.s32.totalorder %s72, %s74
      %p81 = scmp.eq.s32.totalorder %s22, 1
      %p82 = por %p80, %p81
      %p83 = scmp.ne.s32.totalorder %s74, %s75
      %p84 = scmp.eq.s32.totalorder %s22, 0
      %p85 = por %p83, %p84
      %p86 = scmp.ne.s32.totalorder %s74, %s75
      %p87 = scmp.eq.s32.totalorder %s23, 1
      %p88 = por %p86, %p87
      %p90 = scmp.ne.s32.totalorder %s75, %s89
      %p91 = scmp.eq.s32.totalorder %s23, 0
      %p92 = por %p90, %p91
      %s94 = sadd.s32 %s93, 1
      %p97 = scmp.eq.s32.totalorder %s17, 1
      %p98 = scmp.ne.s32.totalorder %s93, %s95
      %p99 = scmp.eq.s32.totalorder %s17, 0
      %p100 = por %p98, %p99
      %p101 = scmp.ne.s32.totalorder %s93, %s95
      %p102 = scmp.eq.s32.totalorder %s22, 1
      %p103 = por %p101, %p102
      %p104 = scmp.ne.s32.totalorder %s95, %s96
      %p105 = scmp.eq.s32.totalorder %s22, 0
      %p106 = por %p104, %p105
      %p107 = scmp.ne.s32.totalorder %s95, %s96
      %p108 = scmp.eq.s32.totalorder %s23, 1
      %p109 = por %p107, %p108
      %p111 = scmp.ne.s32.totalorder %s96, %s110
      %p112 = scmp.eq.s32.totalorder %s23, 0
      %p113 = por %p111, %p112
      %s115 = sadd.s32 %s114, 1
      %p118 = scmp.eq.s32.totalorder %s17, 1
      %p119 = scmp.ne.s32.totalorder %s114, %s116
      %p120 = scmp.eq.s32.totalorder %s17, 0
      %p121 = por %p119, %p120
      %p122 = scmp.ne.s32.totalorder %s114, %s116
      %p123 = scmp.eq.s32.totalorder %s22, 1
      %p124 = por %p122, %p123
      %p125 = scmp.ne.s32.totalorder %s116, %s117
      %p126 = scmp.eq.s32.totalorder %s22, 0
      %p127 = por %p125, %p126
      %p128 = scmp.ne.s32.totalorder %s116, %s117
      %p129 = scmp.eq.s32.totalorder %s23, 1
      %p130 = por %p128, %p129
      %p132 = scmp.ne.s32.totalorder %s117, %s131
      %p133 = scmp.eq.s32.totalorder %s23, 0
      %p134 = por %p132, %p133
      %s135 = ssub.s32 %s17, %s24
      %p136 = scmp.eq.s32.totalorder %s135, 0
      %s138 = sadd.s32 %s137, 1
      %s139 = scalar_select %p136, %s137, %s138
      %p142 = pneg %p136
      %p143 = scmp.eq.s32.totalorder %s17, 1
      %p144 = por %p142, %p143
      %p145 = scmp.ne.s32.totalorder %s137, %s140
      %p146 = scmp.eq.s32.totalorder %s17, 0
      %p147 = por %p145, %p146
      %p148 = scmp.ne.s32.totalorder %s137, %s140
      %p149 = scmp.eq.s32.totalorder %s22, 1
      %p150 = por %p148, %p149
      %p151 = scmp.ne.s32.totalorder %s140, %s141
      %p152 = scmp.eq.s32.totalorder %s22, 0
      %p153 = por %p151, %p152
      %p154 = scmp.ne.s32.totalorder %s140, %s141
      %p155 = scmp.eq.s32.totalorder %s23, 1
      %p156 = por %p154, %p155
      %p158 = scmp.ne.s32.totalorder %s141, %s157
      %p159 = scmp.eq.s32.totalorder %s23, 0
      %p160 = por %p158, %p159
      %p161 = scmp.le.s32.totalorder 1, %s17
      %p162 = scmp.lt.s32.totalorder %s17, 3
      %p163 = pnand %p161, %p162
      %p164 = pneg %p163
      // Predicated region
      $region9: #{tpu_custom_call.1} parent=5 // pred_check
        _
      $region10: #{tpu_custom_call.1} parent=5 // pred_check_branch
        %166 = sbr.rel (%p163) target = $region12
      $region11: #{tpu_custom_call.1} parent=5 // pred_region
        %s167 = ssub.s32 %s17, 1
        // Predicated region
        $region13: #{tpu_custom_call.1} parent=11 // pred_check
          %p168 = pneg %p64
        $region14: #{tpu_custom_call.1} parent=11 // pred_check_branch
          %170 = sbr.rel (%p168) target = $region16
        $region15: #{tpu_custom_call.1} parent=11 // pred_region
          _
        $region16: #{tpu_custom_call.1} parent=11 // pred_fallthru
          _
        // Predicated region
        $region17: #{tpu_custom_call.1} parent=11 // pred_check
          %p171 = pneg %p85
        $region18: #{tpu_custom_call.1} parent=11 // pred_check_branch
          %173 = sbr.rel (%p171) target = $region20
        $region19: #{tpu_custom_call.1} parent=11 // pred_region
          _
        $region20: #{tpu_custom_call.1} parent=11 // pred_fallthru
          _
        // Predicated region
        $region21: #{tpu_custom_call.1} parent=11 // pred_check
          %p174 = pneg %p106
        $region22: #{tpu_custom_call.1} parent=11 // pred_check_branch
          %176 = sbr.rel (%p174) target = $region24
        $region23: #{tpu_custom_call.1} parent=11 // pred_region
          _
        $region24: #{tpu_custom_call.1} parent=11 // pred_fallthru
          _
        // Predicated region
        $region25: #{tpu_custom_call.1} parent=11 // pred_check
          %p177 = pneg %p127
        $region26: #{tpu_custom_call.1} parent=11 // pred_check_branch
          %179 = sbr.rel (%p177) target = $region28
        $region27: #{tpu_custom_call.1} parent=11 // pred_region
          _
        $region28: #{tpu_custom_call.1} parent=11 // pred_fallthru
          _
      $region12: #{tpu_custom_call.1} parent=5 // pred_fallthru
        _
      %p180 = scmp.lt.s32.totalorder %s17, 2
      // Predicated region
      $region29: #{tpu_custom_call.1} parent=5 // pred_check
        %p181 = pneg %p180
      $region30: #{tpu_custom_call.1} parent=5 // pred_check_branch
        %183 = sbr.rel (%p181) target = $region32
      $region31: #{tpu_custom_call.1} parent=5 // pred_region
        // Predicated region
        $region33: #{tpu_custom_call.1} parent=31 // pred_check
          %p184 = pneg %p37
        $region34: #{tpu_custom_call.1} parent=31 // pred_check_branch
          %186 = sbr.rel (%p184) target = $region36
        $region35: #{tpu_custom_call.1} parent=31 // pred_region
          %s187 = sand.u32 %s27, 1
          %s188 = scalar_lea.sflag [#allocation3], %s187
          %s189 = sand.u32 %s27, 1
          %s190 = smul.addr %s189, 64
          %s191 = scalar_lea.vmem [#allocation2], %s190
          %193 = vsyncadd %s188, 0
          %s194 = smul.addr %s17, 8
          %s195 = smul.addr %s194, 8
          %s196 = scalar_lea.hbm %s0, %s195
          %s197 = sshll.u32 %s196, 4
          %s198 = int_to_ptr.hbm [resolvable:$true] %s197
          %s199 = sshll.u32 %s191, 4
          %s200 = int_to_ptr.vmem [resolvable:$true] %s199
          %205 = dma.hbm_to_vmem [thread:$0]  %s198, 1024, %s200, %s188, 256, 256, 16
        $region36: #{tpu_custom_call.1} parent=31 // pred_fallthru
          _
      $region32: #{tpu_custom_call.1} parent=5 // pred_fallthru
        _
      %p206 = scmp.le.s32.totalorder 1, %s17
      %p207 = scmp.lt.s32.totalorder %s17, 3
      %p208 = pnand %p206, %p207
      %p209 = pneg %p208
      // Predicated region
      $region37: #{tpu_custom_call.1} parent=5 // pred_check
        _
      $region38: #{tpu_custom_call.1} parent=5 // pred_check_branch
        %211 = sbr.rel (%p208) target = $region40
      $region39: #{tpu_custom_call.1} parent=5 // pred_region
        %s212 = ssub.s32 %s17, 1
        %s213 = sand.u32 %s30, 1
        %s214 = scalar_lea.sflag [#allocation3], %s213
        %s215 = sand.u32 %s30, 1
        %s216 = smul.addr %s215, 64
        %s217 = scalar_lea.vmem [#allocation2], %s216
        // Predicated region
        $region41: #{tpu_custom_call.1} parent=39 // pred_check
          %p218 = pneg %p43
        $region42: #{tpu_custom_call.1} parent=39 // pred_check_branch
          %220 = sbr.rel (%p218) target = $region44
        $region43: #{tpu_custom_call.1} parent=39 // pred_region
          %222 = dma.done %s214, 1024
        $region44: #{tpu_custom_call.1} parent=39 // pred_fallthru
          _
        %s223 = sand.u32 %s30, 1
        %s224 = scalar_lea.sflag [#allocation3], %s223
        %s225 = sand.u32 %s30, 1
        %s226 = smul.addr %s225, 64
        %s227 = scalar_lea.vmem [#allocation2], %s226
        %p228 = pneg %p43
        %p229 = pneg %p40
        %p230 = pneg %p64
        %p231 = pneg %p61
        %p232 = pneg %p85
        %p233 = pneg %p82
        %p234 = pneg %p106
        %p235 = pneg %p103
        %p236 = pneg %p127
        %p237 = pneg %p124
        %p238 = pneg %p153
        %p239 = pneg %p150
        %s240 = sand.u32 %s140, 1
        %s241 = scalar_lea.sflag [#allocation4], %s240
        %s242 = sand.u32 %s140, 1
        %s243 = smul.addr %s242, 64
        %s244 = scalar_lea.vmem [#allocation5], %s243
        %v245 = vld [vmem:[%s217] sm:$0xff]
        %v246 = vld [vmem:[%s217 + $0x8] sm:$0xff]
        %v247 = vld [vmem:[%s217 + $0x10] sm:$0xff]
        %v248 = vld [vmem:[%s217 + $0x18] sm:$0xff]
        %v249 = vld [vmem:[%s217 + $0x20] sm:$0xff]
        %v250 = vld [vmem:[%s217 + $0x28] sm:$0xff]
        %v251 = vld [vmem:[%s217 + $0x30] sm:$0xff]
        %v252 = vld [vmem:[%s217 + $0x38] sm:$0xff]
        %v253 = vadd.f32 %v245, %v246
        %254 = vadd.xlane.f32.xlu0 %v253
        %v255 = vpop.xlane.xlu0 %254
        %v256 = vadd.f32 %v247, %v248
        %257 = vadd.xlane.f32.xlu0 %v256
        %v258 = vpop.xlane.xlu0 %257
        %v259 = vadd.f32 %v249, %v250
        %260 = vadd.xlane.f32.xlu0 %v259
        %v261 = vpop.xlane.xlu0 %260
        %v262 = vadd.f32 %v251, %v252
        %263 = vadd.xlane.f32.xlu0 %v262
        %v264 = vpop.xlane.xlu0 %263
        %v265 = vmul.f32 %v255, 0.00390625
        %v266 = vmul.f32 %v258, 0.00390625
        %v267 = vmul.f32 %v261, 0.00390625
        %v268 = vmul.f32 %v264, 0.00390625
        %v269 = vld [vmem:[%s1] sm:$0xff]
        %v270 = vld [vmem:[%s1 + $0x8] sm:$0xff]
        %v271 = vld [vmem:[%s1 + $0x10] sm:$0xff]
        %v272 = vld [vmem:[%s1 + $0x18] sm:$0xff]
        %v273 = vld [vmem:[%s2] sm:$0x1]
        %v274 = vld [vmem:[%s3] sm:$0xff]
        %v275 = vld [vmem:[%s3 + $0x8] sm:$0xff]
        %v276 = vld [vmem:[%s3 + $0x10] sm:$0xff]
        %v277 = vld [vmem:[%s3 + $0x18] sm:$0xff]
        %v278 = vld [vmem:[%s4] sm:$0xff]
        %v279 = vld [vmem:[%s4 + $0x8] sm:$0xff]
        %v280 = vld [vmem:[%s4 + $0x10] sm:$0xff]
        %v281 = vld [vmem:[%s4 + $0x18] sm:$0xff]
        %v282 = vmul.f32 %v269, %v265
        %v283 = vmul.f32 %v270, %v266
        %v284 = vmul.f32 %v271, %v267
        %v285 = vmul.f32 %v272, %v268
        %vm286 = vcmask 7168
        %v287 = vsel %vm286, %v282, 0.0
        %v288 = vsel %vm286, %v283, 0.0
        %v289 = vadd.f32 %v287, %v288
        %v290 = vsel %vm286, %v284, 0.0
        %v291 = vadd.f32 %v289, %v290
        %v292 = vsel %vm286, %v285, 0.0
        %v293 = vadd.f32 %v291, %v292
        %v294 = vrot.slane %v293, 4
        %v295 = vadd.f32 %v293, %v294
        %v296 = vrot.slane %v295, 2
        %v297 = vadd.f32 %v295, %v296
        %v298 = vrot.slane %v297, 1
        %v299 = vadd.f32 %v297, %v298
        %v300 = vadd.f32 %v299, %v273
        %v301 = vmax.f32 %v300, 0.0
        %v302 = vperm.slane %v301, 0
        %v303 = vmul.f32 %v274, %v302
        %v304 = vmul.f32 %v275, %v302
        %v305 = vmul.f32 %v276, %v302
        %v306 = vmul.f32 %v277, %v302
        %v307 = vadd.f32 %v278, %v303
        %v308 = vadd.f32 %v279, %v304
        %v309 = vadd.f32 %v280, %v305
        %v310 = vadd.f32 %v281, %v306
        %vm311 = vcmask 15368
        %v312 = vsel %vm311, %v282, 0.0
        %v313 = vsel %vm311, %v283, 0.0
        %v314 = vadd.f32 %v312, %v313
        %v315 = vsel %vm311, %v284, 0.0
        %v316 = vadd.f32 %v314, %v315
        %v317 = vsel %vm311, %v285, 0.0
        %v318 = vadd.f32 %v316, %v317
        %v319 = vrot.slane %v318, 4
        %v320 = vadd.f32 %v318, %v319
        %v321 = vrot.slane %v320, 2
        %v322 = vadd.f32 %v320, %v321
        %v323 = vrot.slane %v322, 1
        %v324 = vadd.f32 %v322, %v323
        %v325 = vadd.f32 %v324, %v273
        %v326 = vmax.f32 %v325, 0.0
        %v327 = vperm.slane %v326, 0
        %v328 = vmul.f32 %v274, %v327
        %v329 = vmul.f32 %v275, %v327
        %v330 = vmul.f32 %v276, %v327
        %v331 = vmul.f32 %v277, %v327
        %336 = vrot.lane.b32.xlu0 %v328, 127
        %v337 = vpop.permute.xlu0 %336
        %338 = vrot.lane.b32.xlu0 %v329, 127
        %v339 = vpop.permute.xlu0 %338
        %340 = vrot.lane.b32.xlu0 %v330, 127
        %v341 = vpop.permute.xlu0 %340
        %342 = vrot.lane.b32.xlu0 %v331, 127
        %v343 = vpop.permute.xlu0 %342
        %v348 = vadd.f32 %v307, %v337
        %v349 = vadd.f32 %v308, %v339
        %v350 = vadd.f32 %v309, %v341
        %v351 = vadd.f32 %v310, %v343
        %v352 = vxor.u32 %v348, 2147483648
        %v353 = vxor.u32 %v349, 2147483648
        %v354 = vxor.u32 %v350, 2147483648
        %v355 = vxor.u32 %v351, 2147483648
        %v356 = vmul.f32 %v352, 1.442695
        %v357 = vpow.pop %v356
        %v358 = vmul.f32 %v353, 1.442695
        %v359 = vpow.pop %v358
        %v360 = vmul.f32 %v354, 1.442695
        %v361 = vpow.pop %v360
        %v362 = vmul.f32 %v355, 1.442695
        %v363 = vpow.pop %v362
        %v364 = vadd.f32 %v357, 1.0
        %v365 = vadd.f32 %v359, 1.0
        %v366 = vadd.f32 %v361, 1.0
        %v367 = vadd.f32 %v363, 1.0
        %v368 = vrcp.pop %v364
        %v369 = vmul.f32 %v364, %v368
        %v370 = vsub.f32 1.0, %v369
        %v371 = vmul.f32 %v368, %v370
        %v372 = vadd.f32 %v368, %v371
        %vm373 = vweird.f32 %v364
        %vm374 = vweird.f32 %v368
        %vm375 = vmor %vm373, %vm374
        %v376 = vsel %vm375, %v368, %v372
        %v377 = vand.u32 2147483647, %v364
        %vm378 = vcmp.eq.f32.partialorder %v377, 8.507059e+37
        %v379 = vand.u32 %v364, 2147483648
        %v380 = vor.u32 1.1754944e-38, %v379
        %v381 = vsel %vm378, %v380, %v376
        %v382 = vmul.f32 1.0, %v381
        %v383 = vrcp.pop %v365
        %v384 = vmul.f32 %v365, %v383
        %v385 = vsub.f32 1.0, %v384
        %v386 = vmul.f32 %v383, %v385
        %v387 = vadd.f32 %v383, %v386
        %vm388 = vweird.f32 %v365
        %vm389 = vweird.f32 %v383
        %vm390 = vmor %vm388, %vm389
        %v391 = vsel %vm390, %v383, %v387
        %v392 = vand.u32 2147483647, %v365
        %vm393 = vcmp.eq.f32.partialorder %v392, 8.507059e+37
        %v394 = vand.u32 %v365, 2147483648
        %v395 = vor.u32 1.1754944e-38, %v394
        %v396 = vsel %vm393, %v395, %v391
        %v397 = vmul.f32 1.0, %v396
        %v398 = vrcp.pop %v366
        %v399 = vmul.f32 %v366, %v398
        %v400 = vsub.f32 1.0, %v399
        %v401 = vmul.f32 %v398, %v400
        %v402 = vadd.f32 %v398, %v401
        %vm403 = vweird.f32 %v366
        %vm404 = vweird.f32 %v398
        %vm405 = vmor %vm403, %vm404
        %v406 = vsel %vm405, %v398, %v402
        %v407 = vand.u32 2147483647, %v366
        %vm408 = vcmp.eq.f32.partialorder %v407, 8.507059e+37
        %v409 = vand.u32 %v366, 2147483648
        %v410 = vor.u32 1.1754944e-38, %v409
        %v411 = vsel %vm408, %v410, %v406
        %v412 = vmul.f32 1.0, %v411
        %v413 = vrcp.pop %v367
        %v414 = vmul.f32 %v367, %v413
        %v415 = vsub.f32 1.0, %v414
        %v416 = vmul.f32 %v413, %v415
        %v417 = vadd.f32 %v413, %v416
        %vm418 = vweird.f32 %v367
        %vm419 = vweird.f32 %v413
        %vm420 = vmor %vm418, %vm419
        %v421 = vsel %vm420, %v413, %v417
        %v422 = vand.u32 2147483647, %v367
        %vm423 = vcmp.eq.f32.partialorder %v422, 8.507059e+37
        %v424 = vand.u32 %v367, 2147483648
        %v425 = vor.u32 1.1754944e-38, %v424
        %v426 = vsel %vm423, %v425, %v421
        %v427 = vmul.f32 1.0, %v426
        %429 = vset.pattern.permute.xlu0 0
        %430 = vperm.xlu0 %429, %v382
        %v431 = vpop.permute.xlu0 %430
        %434 = vset.pattern.permute.xlu0 0
        %435 = vperm.xlu0 %434, %v397
        %v436 = vpop.permute.xlu0 %435
        %439 = vset.pattern.permute.xlu0 0
        %440 = vperm.xlu0 %439, %v412
        %v441 = vpop.permute.xlu0 %440
        %444 = vset.pattern.permute.xlu0 0
        %445 = vperm.xlu0 %444, %v427
        %v446 = vpop.permute.xlu0 %445
        %v448 = vmul.f32 %v245, %v431
        %v449 = vmul.f32 %v246, %v431
        %v450 = vmul.f32 %v247, %v436
        %v451 = vmul.f32 %v248, %v436
        %v452 = vmul.f32 %v249, %v441
        %v453 = vmul.f32 %v250, %v441
        %v454 = vmul.f32 %v251, %v446
        %v455 = vmul.f32 %v252, %v446
        %456 = vst [vmem:[%s244] sm:$0xff] %v448
        %457 = vst [vmem:[%s244 + $0x8] sm:$0xff] %v449
        %458 = vst [vmem:[%s244 + $0x10] sm:$0xff] %v450
        %459 = vst [vmem:[%s244 + $0x18] sm:$0xff] %v451
        %460 = vst [vmem:[%s244 + $0x20] sm:$0xff] %v452
        %461 = vst [vmem:[%s244 + $0x28] sm:$0xff] %v453
        %462 = vst [vmem:[%s244 + $0x30] sm:$0xff] %v454
        %463 = vst [vmem:[%s244 + $0x38] sm:$0xff] %v455
        %s464 = sand.u32 %s140, 1
        %s465 = scalar_lea.sflag [#allocation4], %s464
        %s466 = sand.u32 %s140, 1
        %s467 = smul.addr %s466, 64
        %s468 = scalar_lea.vmem [#allocation5], %s467
        // Predicated region
        $region45: #{tpu_custom_call.1} parent=39 // pred_check
          %p469 = pneg %p150
        $region46: #{tpu_custom_call.1} parent=39 // pred_check_branch
          %471 = sbr.rel (%p469) target = $region48
        $region47: #{tpu_custom_call.1} parent=39 // pred_region
          %473 = vsyncadd %s465, 0
          %s474 = smul.addr %s22, 8
          %s475 = smul.addr %s474, 8
          %s476 = scalar_lea.hbm %s5, %s475
          %s477 = sshll.u32 %s468, 4
          %s478 = int_to_ptr.vmem [resolvable:$true] %s477
          %s479 = sshll.u32 %s476, 4
          %s480 = int_to_ptr.hbm [resolvable:$true] %s479
          %485 = dma.vmem_to_hbm [thread:$0]  %s478, 1024, %s480, %s465, 256, 256, 16
        $region48: #{tpu_custom_call.1} parent=39 // pred_fallthru
          _
      $region40: #{tpu_custom_call.1} parent=5 // pred_fallthru
        _
      %p486 = scmp.le.s32.totalorder 2, %s17
      // Predicated region
      $region49: #{tpu_custom_call.1} parent=5 // pred_check
        %p487 = pneg %p486
      $region50: #{tpu_custom_call.1} parent=5 // pred_check_branch
        %489 = sbr.rel (%p487) target = $region52
      $region51: #{tpu_custom_call.1} parent=5 // pred_region
        %s490 = ssub.s32 %s17, 2
        // Predicated region
        $region53: #{tpu_custom_call.1} parent=51 // pred_check
          %p491 = pneg %p156
        $region54: #{tpu_custom_call.1} parent=51 // pred_check_branch
          %493 = sbr.rel (%p491) target = $region56
        $region55: #{tpu_custom_call.1} parent=51 // pred_region
          %s494 = sand.u32 %s141, 1
          %s495 = scalar_lea.sflag [#allocation4], %s494
          %s496 = sand.u32 %s141, 1
          %s497 = smul.addr %s496, 64
          %s498 = scalar_lea.vmem [#allocation5], %s497
          %500 = dma.done %s495, 1024
        $region56: #{tpu_custom_call.1} parent=51 // pred_fallthru
          _
      $region52: #{tpu_custom_call.1} parent=5 // pred_fallthru
        _
    $region6: #{tpu_custom_call.1} parent=1 // loop_footer
      %s21 = sadd.s32 1, %s17
    $region7: #{tpu_custom_call.1} parent=1 // loop_footer_branch
      %16 = sbr.rel target = $region3
    $region8: #{tpu_custom_call.1} parent=1 // loop_exit
      _
    %501 = vsyncpa [#allocation3], 1
    %s502 = scalar_lea.sflag [#allocation3], 1
    %503 = vsyncpa %s502, 1
    %504 = vsyncpa [#allocation4], 1
    %s505 = scalar_lea.sflag [#allocation4], 1
    %506 = vsyncpa %s505, 1

</llo_original>
